<compile_context>
chip_gen: v5e
topology: v5e:2x2
jax: 0.10.0
libtpu: 0.0.40
codegen_flags: <defaults>
</compile_context>

<pallas_src>
import jax
import jax.numpy as jnp
from jax.experimental import pallas as pl
from jax.experimental.pallas import tpu as pltpu


def _round_up(x, m):
    return ((x + m - 1) // m) * m


# ----------------------------------------------------------------------------
# Pallas kernel: segment-mean over sorted voxel slots via one-hot matmul
# ----------------------------------------------------------------------------
def _scatter_mean_kernel(mtile_ref, ptile_ref, flags_ref,
                         seg_ref, featT_ref, out_ref, acc_ref):
    """1-D grid over schedule steps (scalar-prefetch driven).

    mtile_ref/ptile_ref/flags_ref : (G,) int32 SMEM schedule tables
    seg_ref  : (TP, 1)   int32   per-point voxel slot id (sorted; sentinel >= m_slots)
    featT_ref: (C+1, TP) float32 [features | 1.0]^T (trailing ones row = count)
    out_ref  : (C, TM)   float32 per-voxel mean (lane-dense, resident per voxel tile)
    acc_ref  : (C+1, TM) float32 VMEM scratch accumulator (sums + counts)
    flags bit0 = first step of this voxel tile (zero acc)
          bit1 = active step (accumulate); padding steps beyond the schedule skip
          bit2 = last step of this voxel tile (finalize + write out block)
    """
    g = pl.program_id(0)
    flags = flags_ref[g]
    tm = acc_ref.shape[1]
    c = out_ref.shape[0]
    m_base = mtile_ref[g] * tm

    @pl.when((flags & 1) != 0)
    def _init():
        acc_ref[...] = jnp.zeros_like(acc_ref)

    @pl.when((flags & 2) != 0)
    def _accumulate():
        # Tile offset applied on the (TP,1) seg vector once (cheap) instead of the
        # full (TP,TM) iota every step.
        seg_local = seg_ref[...] - m_base          # (TP, 1) int32
        featT = featT_ref[...]                     # (C+1, TP) f32
        tp = seg_local.shape[0]
        chunk = 128
        # Chunk the TM axis so each one-hot slice is (TP, 128) f32 (<= 64 vregs)
        # and never round-trips a full (TP, TM) temporary through VMEM.
        for c0 in range(0, tm, chunk):
            lanes = jax.lax.broadcasted_iota(jnp.int32, (tp, chunk), 1) + c0
            onehot = (seg_local == lanes).astype(jnp.float32)       # (TP, chunk)
            # (C+1, chunk) += featT @ onehot  -- canonical MXU orientation, K = TP.
            acc_ref[:, c0:c0 + chunk] += jax.lax.dot_general(
                featT, onehot,
                dimension_numbers=(((1,), (0,)), ((), ())),
                preferred_element_type=jnp.float32)

    @pl.when((flags & 4) != 0)
    def _finalize():
        acc = acc_ref[...]
        inv_cnt = 1.0 / jnp.maximum(acc[c:c + 1, :], 1.0)   # one (1,TM) reciprocal row
        out_ref[...] = acc[:c, :] * inv_cnt


def _scatter_mean_pallas(featT, seg2d, mtile, ptile, flags, *,
                         m_slots, tp, tm, vmem_limit_bytes=32 * 1024 * 1024):
    """featT: (C+1, N_pad) f32 sorted by slot, seg2d: (N_pad, 1) i32 sorted,
    mtile/ptile/flags: (G,) i32 schedule  ->  (C, m_slots) f32 per-voxel means."""
    cp1, n_pad = featT.shape
    c = cp1 - 1
    assert n_pad % tp == 0 and m_slots % tm == 0
    g_static = mtile.shape[0]
    return pl.pallas_call(
        _scatter_mean_kernel,
        out_shape=jax.ShapeDtypeStruct((c, m_slots), jnp.float32),
        grid_spec=pltpu.PrefetchScalarGridSpec(
            num_scalar_prefetch=3,
            grid=(g_static,),
            in_specs=[
                # NOTE: (TP,1) seg blocks are lane-padded in VMEM (~TP*512 B/buffer);
                # acceptable at TP=512, keeps the one-hot build transpose-free.
                pl.BlockSpec((tp, 1), lambda g, mt, pt, fl: (pt[g], 0)),
                pl.BlockSpec((cp1, tp), lambda g, mt, pt, fl: (0, pt[g])),
            ],
            out_specs=pl.BlockSpec((c, tm), lambda g, mt, pt, fl: (0, mt[g])),
            scratch_shapes=[pltpu.VMEM((cp1, tm), jnp.float32)],
        ),
        compiler_params=pltpu.CompilerParams(
            dimension_semantics=("arbitrary",),
            vmem_limit_bytes=vmem_limit_bytes),
    )(mtile, ptile, flags, seg2d, featT)


# ----------------------------------------------------------------------------
# Host-side schedule: which (voxel tile, point tile) pair each grid step handles
# ----------------------------------------------------------------------------
def _build_schedule(seg_sorted, tp, n_tiles, tm, m_tiles):
    """seg_sorted: (N_pad,) non-decreasing slot ids (sentinel >= m_slots at the end).

    Returns int32 arrays (mtile, ptile, flags) of static length n_tiles + m_tiles.
    Bound proof: sum over voxel tiles of (ceil(end/TP) - floor(start/TP), min 1)
    telescopes to <= n_tiles + m_tiles (one extra boundary tile per voxel tile).
    """
    edges = jnp.arange(m_tiles + 1, dtype=jnp.int32) * tm
    bounds = jnp.searchsorted(seg_sorted, edges, side='left').astype(jnp.int32)
    start, end = bounds[:-1], bounds[1:]
    pt_lo = start // tp
    pt_hi = (end + tp - 1) // tp
    # >= 1 step per voxel tile so every output block is written (empty tiles -> zeros)
    counts = jnp.maximum(pt_hi - pt_lo, 1).astype(jnp.int32)
    offs = jnp.concatenate(
        [jnp.zeros((1,), jnp.int32), jnp.cumsum(counts, dtype=jnp.int32)])
    total = offs[-1]

    g_static = n_tiles + m_tiles
    g = jnp.arange(g_static, dtype=jnp.int32)
    m_of_g = jnp.clip(
        jnp.searchsorted(offs, g, side='right').astype(jnp.int32) - 1,
        0, m_tiles - 1)
    j_of_g = g - offs[m_of_g]
    p_of_g = jnp.clip(pt_lo[m_of_g] + j_of_g, 0, n_tiles - 1).astype(jnp.int32)

    active = g < total
    first = active & (j_of_g == 0)
    last = active & (j_of_g == counts[m_of_g] - 1)
    flags = (first.astype(jnp.int32)
             + 2 * active.astype(jnp.int32)
             + 4 * last.astype(jnp.int32))
    return m_of_g.astype(jnp.int32), p_of_g, flags


# ----------------------------------------------------------------------------
# DynamicSimpleVFE wrapper (DynamicScatter with mean reduce, average_points=True)
# ----------------------------------------------------------------------------
class DynamicSimpleVFE:
    def __init__(self,
                 voxel_size=(0.2, 0.2, 4),
                 point_cloud_range=(0, -40, -3, 70.4, 40, 1)):
        self.voxel_size = voxel_size
        self.point_cloud_range = point_cloud_range
        self.dx = int(round((point_cloud_range[3] - point_cloud_range[0]) / voxel_size[0]))
        self.dy = int(round((point_cloud_range[4] - point_cloud_range[1]) / voxel_size[1]))
        self.dz = int(round((point_cloud_range[5] - point_cloud_range[2]) / voxel_size[2]))
        # (no learnable parameters in this module)

    def __call__(self, features, coors, *, point_tile=512, voxel_tile=512,
                 max_voxels=None):
        """features: (N, C) float, coors: (N, 4) int32 [batch, z, y, x].

        Returns (voxel_features (M_slots, C), voxel_coors (M_slots, 4), num_voxels ())
        where only the first `num_voxels` rows are valid (static-shape padding).
        """
        assert point_tile % 128 == 0 and voxel_tile % 128 == 0
        n_orig, c = features.shape
        coors = coors.astype(jnp.int32)

        # Pad N to a multiple of the point tile; padded points are invalid (dropped).
        n_pad = _round_up(n_orig, point_tile)
        if n_pad != n_orig:
            features = jnp.pad(features, ((0, n_pad - n_orig), (0, 0)))
            coors = jnp.pad(coors, ((0, n_pad - n_orig), (0, 0)), constant_values=-1)

        # Voxel-slot capacity (static) and tile sizes.
        m_cap = n_orig if max_voxels is None else min(int(max_voxels), n_orig)
        tm = min(voxel_tile, _round_up(m_cap, 128))
        m_slots = _round_up(m_cap, tm)
        m_tiles = m_slots // tm
        n_tiles = n_pad // point_tile

        # Linearize (batch, z, y, x) -> single key. Use int64 when x64 is enabled.
        # TODO(synk): with the default int32 key, batch * dz*dy*dx must stay < 2**31;
        # enable jax_enable_x64 (or a row-wise unique) for larger grids.
        key_dtype = jnp.int64 if jax.config.jax_enable_x64 else jnp.int32
        big = jnp.iinfo(key_dtype).max
        valid = jnp.all(coors >= 0, axis=1)
        ck = coors.astype(key_dtype)
        key = ((ck[:, 0] * self.dz + ck[:, 1]) * self.dy + ck[:, 2]) * self.dx + ck[:, 3]
        key = jnp.where(valid, key, big)

        uniq, inv = jnp.unique(key, size=n_pad, fill_value=big, return_inverse=True)
        # slot id per point; invalid / dropped points -> sentinel (== m_slots, never
        # inside any tile's [m*TM, (m+1)*TM) range), so they sort to the end and are
        # excluded from every voxel tile's point range.
        seg = jnp.where(valid, inv.reshape(-1).astype(jnp.int32), m_slots)

        # Sort points by slot id so each voxel tile touches a contiguous point range.
        order = jnp.argsort(seg)
        seg_sorted = seg[order]

        # [features | 1]^T (ones row = per-voxel count); zero invalid rows so
        # NaN/Inf in dropped points cannot propagate via 0*x in the matmul.
        feats_aug = jnp.concatenate(
            [features.astype(jnp.float32), jnp.ones((n_pad, 1), jnp.float32)], axis=1)
        feats_aug = jnp.where(valid[:, None], feats_aug, 0.0)
        featT = feats_aug[order].T                               # (C+1, N_pad), sorted

        mtile, ptile, flags = _build_schedule(seg_sorted, point_tile, n_tiles, tm, m_tiles)

        outT = _scatter_mean_pallas(featT, seg_sorted.reshape(n_pad, 1),
                                    mtile, ptile, flags,
                                    m_slots=m_slots, tp=point_tile, tm=tm)
        voxel_feats = outT.T                                     # (m_slots, C)

        # Decode unique keys back to (batch, z, y, x); padding / invalid rows -> -1.
        if m_slots >= n_pad:
            uniq_m = jnp.concatenate(
                [uniq, jnp.full((m_slots - n_pad,), big, key_dtype)])
        else:
            uniq_m = uniq[:m_slots]
        num_voxels = jnp.sum(uniq_m != big)
        xk = uniq_m % self.dx
        r = uniq_m // self.dx
        yk = r % self.dy
        r = r // self.dy
        zk = r % self.dz
        bk = r // self.dz
        voxel_coors = jnp.stack([bk, zk, yk, xk], axis=1)
        voxel_coors = jnp.where((uniq_m == big)[:, None], -1, voxel_coors).astype(jnp.int32)

        return voxel_feats, voxel_coors, num_voxels


# ----------------------------------------------------------------------------
# Demo / self-check
# ----------------------------------------------------------------------------
if __name__ == "__main__":
    N, C = 512, 4
    rng = jax.random.PRNGKey(0)
    k_xyz, k_int, k_b, k_drop = jax.random.split(rng, 4)

    pcr = (0.0, -40.0, -3.0, 70.4, 40.0, 1.0)
    vs = (0.2, 0.2, 4.0)

    lo = jnp.array(pcr[:3], jnp.float32)
    hi = jnp.array(pcr[3:], jnp.float32)
    xyz = lo + jax.random.uniform(k_xyz, (N, 3), jnp.float32) * (hi - lo) * 0.999
    intensity = jax.random.uniform(k_int, (N, 1), jnp.float32)
    features = jnp.concatenate([xyz, intensity], axis=1)          # (N, 4)

    batch_idx = jax.random.randint(k_b, (N,), 0, 2, jnp.int32)
    vox = jnp.floor((xyz - lo) / jnp.array(vs, jnp.float32)).astype(jnp.int32)
    # coors layout [batch, z, y, x] as in mmdet3d
    coors = jnp.stack([batch_idx, vox[:, 2], vox[:, 1], vox[:, 0]], axis=1)
    # mark a few points invalid (coordinate -1), as the voxelizer would
    drop = jax.random.uniform(k_drop, (N,)) < 0.05
    coors = jnp.where(drop[:, None], -1, coors)

    vfe = DynamicSimpleVFE(vs, pcr)
    # small tiles so the demo exercises a multi-tile data-dependent schedule
    voxel_feats, voxel_coors, num_voxels = vfe(
        features, coors, point_tile=128, voxel_tile=128)
    jax.block_until_ready((voxel_feats, voxel_coors, num_voxels))

    # pure-JAX reference (segment mean) for correctness check
    valid = jnp.all(coors >= 0, axis=1)
    big = jnp.iinfo(jnp.int32).max
    key = ((coors[:, 0] * vfe.dz + coors[:, 1]) * vfe.dy + coors[:, 2]) * vfe.dx + coors[:, 3]
    key = jnp.where(valid, key, big)
    m_slots = voxel_feats.shape[0]
    _, inv = jnp.unique(key, size=N, fill_value=big, return_inverse=True)
    seg_ref = jnp.where(valid, inv.reshape(-1), m_slots)
    feats_aug = jnp.concatenate([features, jnp.ones((N, 1), jnp.float32)], axis=1)
    sums = jax.ops.segment_sum(feats_aug, seg_ref, num_segments=m_slots + 1)[:m_slots]
    ref_mean = sums[:, :C] / jnp.maximum(sums[:, C:], 1.0)

    assert voxel_feats.shape == (m_slots, C)
    assert jnp.allclose(voxel_feats, ref_mean, atol=1e-5, rtol=1e-5), "mismatch vs reference"
    assert int(num_voxels) > 0
    print("KERNEL_OK")
</pallas_src>

<mosaic_0001>
module attributes {stable_mosaic.version = 11 : i64} {
  func.func @_scatter_mean_kernel(%arg0: i32, %arg1: memref<8xi32, #tpu.memory_space<smem>>, %arg2: memref<8xi32, #tpu.memory_space<smem>>, %arg3: memref<8xi32, #tpu.memory_space<smem>>, %arg4: memref<128x1xi32, #tpu.memory_space<vmem>>, %arg5: memref<5x128xf32, #tpu.memory_space<vmem>>, %arg6: memref<4x128xf32, #tpu.memory_space<vmem>>, %arg7: memref<5x128xf32, #tpu.memory_space<vmem>>) attributes {dimension_semantics = [#tpu.dimension_semantics<arbitrary>], iteration_bounds = array<i64: 8>, scalar_prefetch = 3 : i64, scratch_operands = 1 : i64, tpu.core_type = #tpu.core_type<tc>, window_params = [{transform_indices = @transform_0, window_bounds = array<i64: 128, 1>}, {transform_indices = @transform_1, window_bounds = array<i64: 5, 128>}, {transform_indices = @transform_2, window_bounds = array<i64: 4, 128>}]} {
    %0 = arith.index_cast %arg0 : i32 to index
    %1 = memref.load %arg3[%0] : memref<8xi32, #tpu.memory_space<smem>>
    %2 = arith.index_cast %arg0 : i32 to index
    %3 = memref.load %arg1[%2] : memref<8xi32, #tpu.memory_space<smem>>
    %c128_i32 = arith.constant 128 : i32
    %4 = arith.muli %3, %c128_i32 : i32
    %c1_i32 = arith.constant 1 : i32
    %5 = arith.andi %1, %c1_i32 : i32
    %c0_i32 = arith.constant 0 : i32
    %6 = arith.cmpi ne, %5, %c0_i32 : i32
    %7 = arith.extui %6 : i1 to i32
    %c0_i32_0 = arith.constant 0 : i32
    %8 = arith.cmpi ne, %7, %c0_i32_0 : i32
    scf.if %8 {
      %cst = arith.constant 0.000000e+00 : f32
      %17 = vector.broadcast %cst : f32 to vector<5x128xf32>
      %c0 = arith.constant 0 : index
      %c0_5 = arith.constant 0 : index
      %18 = vector.load %arg7[%c0, %c0_5] : memref<5x128xf32, #tpu.memory_space<vmem>>, vector<5x128xf32>
      tpu.vector_store %arg7[%c0, %c0_5], %17 {strides = array<i32>} : memref<5x128xf32, #tpu.memory_space<vmem>>, vector<5x128xf32>,
    } else {
    }
    %c2_i32 = arith.constant 2 : i32
    %9 = arith.andi %1, %c2_i32 : i32
    %c0_i32_1 = arith.constant 0 : i32
    %10 = arith.cmpi ne, %9, %c0_i32_1 : i32
    %11 = arith.extui %10 : i1 to i32
    %c0_i32_2 = arith.constant 0 : i32
    %12 = arith.cmpi ne, %11, %c0_i32_2 : i32
    scf.if %12 {
      %c0 = arith.constant 0 : index
      %c0_5 = arith.constant 0 : index
      %17 = vector.load %arg4[%c0, %c0_5] : memref<128x1xi32, #tpu.memory_space<vmem>>, vector<128x1xi32>
      %18 = vector.broadcast %4 : i32 to vector<128x1xi32>
      %19 = arith.subi %17, %18 : vector<128x1xi32>
      %c0_6 = arith.constant 0 : index
      %c0_7 = arith.constant 0 : index
      %20 = vector.load %arg5[%c0_6, %c0_7] : memref<5x128xf32, #tpu.memory_space<vmem>>, vector<5x128xf32>
      %21 = tpu.iota {dimensions = array<i32: 1>} : vector<128x128xi32>
      %c0_i32_8 = arith.constant 0 : i32
      %22 = vector.broadcast %c0_i32_8 : i32 to vector<128x128xi32>
      %23 = arith.addi %21, %22 : vector<128x128xi32>
      %24 = vector.broadcast %19 : vector<128x1xi32> to vector<128x128xi32>
      %25 = arith.cmpi eq, %24, %23 : vector<128x128xi32>
      %26 = arith.extui %25 : vector<128x128xi1> to vector<128x128xi32>
      %27 = arith.sitofp %26 : vector<128x128xi32> to vector<128x128xf32>
      %c0_9 = arith.constant 0 : index
      %c0_10 = arith.constant 0 : index
      %28 = vector.load %arg7[%c0_9, %c0_10] : memref<5x128xf32, #tpu.memory_space<vmem>>, vector<5x128xf32>
      %cst = arith.constant dense<0.000000e+00> : vector<5x128xf32>
      %29 = tpu.matmul %20, %27, %cst {dimension_numbers = #tpu.dot_dimension_numbers<[1], [0], [0], [1], [0, 0, 1, 1], [], []>} : vector<5x128xf32>, vector<128x128xf32>, vector<5x128xf32> -> vector<5x128xf32>
      %30 = arith.addf %28, %29 : vector<5x128xf32>
      %c0_11 = arith.constant 0 : index
      %c0_12 = arith.constant 0 : index
      %31 = vector.load %arg7[%c0_11, %c0_12] : memref<5x128xf32, #tpu.memory_space<vmem>>, vector<5x128xf32>
      tpu.vector_store %arg7[%c0_11, %c0_12], %30 {strides = array<i32>} : memref<5x128xf32, #tpu.memory_space<vmem>>, vector<5x128xf32>,
    } else {
    }
    %c4_i32 = arith.constant 4 : i32
    %13 = arith.andi %1, %c4_i32 : i32
    %c0_i32_3 = arith.constant 0 : i32
    %14 = arith.cmpi ne, %13, %c0_i32_3 : i32
    %15 = arith.extui %14 : i1 to i32
    %c0_i32_4 = arith.constant 0 : i32
    %16 = arith.cmpi ne, %15, %c0_i32_4 : i32
    scf.if %16 {
      %c0 = arith.constant 0 : index
      %c0_5 = arith.constant 0 : index
      %17 = vector.load %arg7[%c0, %c0_5] : memref<5x128xf32, #tpu.memory_space<vmem>>, vector<5x128xf32>
      %18 = vector.extract_strided_slice %17 {offsets = [4, 0], sizes = [1, 128], strides = [1, 1]} : vector<5x128xf32> to vector<1x128xf32>
      %cst = arith.constant 1.000000e+00 : f32
      %19 = vector.broadcast %cst : f32 to vector<1x128xf32>
      %20 = arith.maximumf %18, %19 : vector<1x128xf32>
      %cst_6 = arith.constant 1.000000e+00 : f32
      %21 = vector.broadcast %cst_6 : f32 to vector<1x128xf32>
      %22 = arith.divf %21, %20 : vector<1x128xf32>
      %23 = vector.extract_strided_slice %17 {offsets = [0, 0], sizes = [4, 128], strides = [1, 1]} : vector<5x128xf32> to vector<4x128xf32>
      %24 = vector.broadcast %22 : vector<1x128xf32> to vector<4x128xf32>
      %25 = arith.mulf %23, %24 : vector<4x128xf32>
      %c0_7 = arith.constant 0 : index
      %c0_8 = arith.constant 0 : index
      %26 = vector.load %arg6[%c0_7, %c0_8] : memref<4x128xf32, #tpu.memory_space<vmem>>, vector<4x128xf32>
      tpu.vector_store %arg6[%c0_7, %c0_8], %25 {strides = array<i32>} : memref<4x128xf32, #tpu.memory_space<vmem>>, vector<4x128xf32>,
    } else {
    }
    return
  }
  func.func @transform_0(%arg0: i32, %arg1: memref<8xi32, #tpu.memory_space<smem>>, %arg2: memref<8xi32, #tpu.memory_space<smem>>, %arg3: memref<8xi32, #tpu.memory_space<smem>>) -> (i32, i32) {
    %0 = arith.index_cast %arg0 : i32 to index
    %1 = memref.load %arg2[%0] : memref<8xi32, #tpu.memory_space<smem>>
    %c0_i32 = arith.constant 0 : i32
    %c0_i32_0 = arith.constant 0 : i32
    return %1, %c0_i32 : i32, i32
  }
  func.func @transform_1(%arg0: i32, %arg1: memref<8xi32, #tpu.memory_space<smem>>, %arg2: memref<8xi32, #tpu.memory_space<smem>>, %arg3: memref<8xi32, #tpu.memory_space<smem>>) -> (i32, i32) {
    %0 = arith.index_cast %arg0 : i32 to index
    %1 = memref.load %arg2[%0] : memref<8xi32, #tpu.memory_space<smem>>
    %c0_i32 = arith.constant 0 : i32
    %c0_i32_0 = arith.constant 0 : i32
    return %c0_i32, %1 : i32, i32
  }
  func.func @transform_2(%arg0: i32, %arg1: memref<8xi32, #tpu.memory_space<smem>>, %arg2: memref<8xi32, #tpu.memory_space<smem>>, %arg3: memref<8xi32, #tpu.memory_space<smem>>) -> (i32, i32) {
    %0 = arith.index_cast %arg0 : i32 to index
    %1 = memref.load %arg1[%0] : memref<8xi32, #tpu.memory_space<smem>>
    %c0_i32 = arith.constant 0 : i32
    %c0_i32_0 = arith.constant 0 : i32
    return %c0_i32, %1 : i32, i32
  }
}

</mosaic_0001>

<llo_original>
// kernel: tpu_custom_call.1
$region0: #{tpu_custom_call.1}
  #allocation0 [shape = 'u32[]', space=smem, size = 0x4, offset = 0x4, fixed_abs, tag = 'smem constant byte address 0x4 - core index']
  #allocation1 [shape = 'u32[72,128]{1,0:T(1,128)}', space=vmem, size = 0x9000, scoped, tag = 'internal scratch']
  #allocation2 [shape = 'f32[5,128]{1,0:T(8,128)}', space=vmem, size = 0x1000, scoped, tag = 'scratch operand']
  #allocation3 [shape = 's32[1]{0}', space=sflag, size = 0x4, scoped, tag = 'scoped memory for tpu_custom_call.1']
  #allocation4 [shape = 'u8[512]{0}', space=smem, size = 0x200, scoped, tag = 'prefetched SMEM operand 0']
  #allocation5 [shape = 'u8[512]{0}', space=smem, size = 0x200, scoped, tag = 'prefetched SMEM operand 1']
  #allocation6 [shape = 'u8[512]{0}', space=smem, size = 0x200, scoped, tag = 'prefetched SMEM operand 2']
  %s0 = inlined_call_operand.vmem [shape: s32[8], index: 0, kind: input, shape index: {}]
  %s1 = inlined_call_operand.vmem [shape: s32[8], index: 1, kind: input, shape index: {}]
  %s2 = inlined_call_operand.vmem [shape: s32[8], index: 2, kind: input, shape index: {}]
  %s3 = inlined_call_operand.vmem [shape: s32[512,1], index: 3, kind: input, shape index: {}]
  %s4 = inlined_call_operand.vmem [shape: f32[5,512], index: 4, kind: input, shape index: {}]
  %s5 = inlined_call_operand.hbm [shape: f32[4,512], index: 5, kind: output, shape index: {}]
  %s6 = sld [smem:[#allocation0]]
  $region53: #{tpu_custom_call.1} parent=0
    _
  %s8 = ssub.s32 1, %s6
  %s9 = scalar_select 0, %s8, %s6
  %s11 = sshll.u32 %s0, 4
  %s12 = int_to_ptr.vmem [resolvable:$true] %s11
  %14 = dma.vmem_to_smem %s12, 16, [#allocation4], [#allocation3]
  %s16 = sshll.u32 %s1, 4
  %s17 = int_to_ptr.vmem [resolvable:$true] %s16
  %19 = dma.vmem_to_smem %s17, 16, [#allocation5], [#allocation3]
  %s21 = sshll.u32 %s2, 4
  %s22 = int_to_ptr.vmem [resolvable:$true] %s21
  %24 = dma.vmem_to_smem %s22, 16, [#allocation6], [#allocation3]
  %26 = dma.done [#allocation3], 48
  %27 = sfence
  $region1: #{tpu_custom_call.1} parent=0
    #allocation7 [shape = 'u8[4096]{0}', space=vmem, size = 0x1000, scoped, tag = 'output window, operand 0']
    #allocation8 [shape = 's32[2]{0}', space=sflag, size = 0x8, scoped, tag = 'scoped memory for tpu_custom_call.1']
    %28 = vsyncpa [#allocation8], 0
    %s29 = scalar_lea.sflag [#allocation8], 1
    %30 = vsyncpa %s29, 0
    loop: start=0, step=1, limit=10
    $region2: #{tpu_custom_call.1} parent=1 // loop_pre_header
      _
    $region3: #{tpu_custom_call.1} parent=1 // loop_header
      %s32 = sphi 0, %s36
      %p33 = scmp.ge.s32.totalorder %s32, 10
      %s44 = sphi 0, %s46
      %s47 = sphi 0, %s44
      %s48 = sphi 0, %s47
      %s64 = sphi 0, %s48
      %s72 = sphi 0, %s74
      %s75 = sphi 0, %s72
      %s76 = sphi 0, %s75
      %s92 = sphi 0, %s76
      %s100 = sphi 0, %s102
      %s103 = sphi 0, %s100
      %s104 = sphi 0, %s103
      %s120 = sphi 0, %s104
    $region4: #{tpu_custom_call.1} parent=1 // loop_header_branch
      %35 = sbr.rel (%p33) target = $region8
    $region5: #{tpu_custom_call.1} parent=1 // loop_body
      %s37 = ssub.s32 %s32, 1
      %s38 = ssub.s32 %s32, 2
      %s39 = sadd.s32 %s32, 1
      %s40 = sld [smem:[#allocation5 + %s32]]
      %s41 = sld [smem:[#allocation5 + %s39]]
      %s42 = ssub.s32 %s40, %s41
      %p43 = scmp.eq.s32.totalorder %s42, 0
      %s45 = sadd.s32 %s44, 1
      %s46 = scalar_select %p43, %s44, %s45
      %p49 = pneg %p43
      %p50 = scmp.eq.s32.totalorder %s32, 7
      %p51 = por %p49, %p50
      %p52 = scmp.ne.s32.totalorder %s44, %s47
      %p53 = scmp.eq.s32.totalorder %s32, 0
      %p54 = por %p52, %p53
      %p55 = scmp.ne.s32.totalorder %s44, %s47
      %p56 = scmp.eq.s32.totalorder %s37, 7
      %p57 = por %p55, %p56
      %p58 = scmp.ne.s32.totalorder %s47, %s48
      %p59 = scmp.eq.s32.totalorder %s37, 0
      %p60 = por %p58, %p59
      %p61 = scmp.ne.s32.totalorder %s47, %s48
      %p62 = scmp.eq.s32.totalorder %s38, 7
      %p63 = por %p61, %p62
      %p65 = scmp.ne.s32.totalorder %s48, %s64
      %p66 = scmp.eq.s32.totalorder %s38, 0
      %p67 = por %p65, %p66
      %s68 = sld [smem:[#allocation5 + %s32]]
      %s69 = sld [smem:[#allocation5 + %s39]]
      %s70 = ssub.s32 %s68, %s69
      %p71 = scmp.eq.s32.totalorder %s70, 0
      %s73 = sadd.s32 %s72, 1
      %s74 = scalar_select %p71, %s72, %s73
      %p77 = pneg %p71
      %p78 = scmp.eq.s32.totalorder %s32, 7
      %p79 = por %p77, %p78
      %p80 = scmp.ne.s32.totalorder %s72, %s75
      %p81 = scmp.eq.s32.totalorder %s32, 0
      %p82 = por %p80, %p81
      %p83 = scmp.ne.s32.totalorder %s72, %s75
      %p84 = scmp.eq.s32.totalorder %s37, 7
      %p85 = por %p83, %p84
      %p86 = scmp.ne.s32.totalorder %s75, %s76
      %p87 = scmp.eq.s32.totalorder %s37, 0
      %p88 = por %p86, %p87
      %p89 = scmp.ne.s32.totalorder %s75, %s76
      %p90 = scmp.eq.s32.totalorder %s38, 7
      %p91 = por %p89, %p90
      %p93 = scmp.ne.s32.totalorder %s76, %s92
      %p94 = scmp.eq.s32.totalorder %s38, 0
      %p95 = por %p93, %p94
      %s96 = sld [smem:[#allocation4 + %s32]]
      %s97 = sld [smem:[#allocation4 + %s39]]
      %s98 = ssub.s32 %s96, %s97
      %p99 = scmp.eq.s32.totalorder %s98, 0
      %s101 = sadd.s32 %s100, 1
      %s102 = scalar_select %p99, %s100, %s101
      %p105 = pneg %p99
      %p106 = scmp.eq.s32.totalorder %s32, 7
      %p107 = por %p105, %p106
      %p108 = scmp.ne.s32.totalorder %s100, %s103
      %p109 = scmp.eq.s32.totalorder %s32, 0
      %p110 = por %p108, %p109
      %p111 = scmp.ne.s32.totalorder %s100, %s103
      %p112 = scmp.eq.s32.totalorder %s37, 7
      %p113 = por %p111, %p112
      %p114 = scmp.ne.s32.totalorder %s103, %s104
      %p115 = scmp.eq.s32.totalorder %s37, 0
      %p116 = por %p114, %p115
      %p117 = scmp.ne.s32.totalorder %s103, %s104
      %p118 = scmp.eq.s32.totalorder %s38, 7
      %p119 = por %p117, %p118
      %p121 = scmp.ne.s32.totalorder %s104, %s120
      %p122 = scmp.eq.s32.totalorder %s38, 0
      %p123 = por %p121, %p122
      %p124 = scmp.le.s32.totalorder 1, %s32
      %p125 = scmp.lt.s32.totalorder %s32, 9
      %p126 = pnand %p124, %p125
      %p127 = pneg %p126
      // Predicated region
      $region9: #{tpu_custom_call.1} parent=5 // pred_check
        _
      $region10: #{tpu_custom_call.1} parent=5 // pred_check_branch
        %129 = sbr.rel (%p126) target = $region12
      $region11: #{tpu_custom_call.1} parent=5 // pred_region
        %s130 = ssub.s32 %s32, 1
      $region12: #{tpu_custom_call.1} parent=5 // pred_fallthru
        _
      %p131 = scmp.lt.s32.totalorder %s32, 8
      // Predicated region
      $region13: #{tpu_custom_call.1} parent=5 // pred_check
        %p132 = pneg %p131
      $region14: #{tpu_custom_call.1} parent=5 // pred_check_branch
        %134 = sbr.rel (%p132) target = $region16
      $region15: #{tpu_custom_call.1} parent=5 // pred_region
        // Predicated region
        $region17: #{tpu_custom_call.1} parent=15 // pred_check
          %p135 = pneg %p54
        $region18: #{tpu_custom_call.1} parent=15 // pred_check_branch
          %137 = sbr.rel (%p135) target = $region20
        $region19: #{tpu_custom_call.1} parent=15 // pred_region
          %s138 = sld [smem:[#allocation5 + %s32]]
          %s139 = smul.u32 16, %s138
          %p140 = scmp.lt.s32.totalorder %s139, 63
          %s141 = scalar_select %p140, %s139, 63
          %s142 = smul.addr %s141, 8
          %s143 = scalar_lea.vmem %s3, %s142
          %s144 = sld [smem:[#allocation5 + %s32]]
          %s145 = smul.u32 16, %s144
        $region20: #{tpu_custom_call.1} parent=15 // pred_fallthru
          _
        // Predicated region
        $region21: #{tpu_custom_call.1} parent=15 // pred_check
          %p146 = pneg %p82
        $region22: #{tpu_custom_call.1} parent=15 // pred_check_branch
          %148 = sbr.rel (%p146) target = $region24
        $region23: #{tpu_custom_call.1} parent=15 // pred_region
          %s149 = sld [smem:[#allocation5 + %s32]]
          %p150 = scmp.lt.s32.totalorder %s149, 3
          %s151 = scalar_select %p150, %s149, 3
          %s152 = smul.addr %s151, 8
          %s153 = scalar_lea.vmem %s4, %s152
          %s154 = sld [smem:[#allocation5 + %s32]]
        $region24: #{tpu_custom_call.1} parent=15 // pred_fallthru
          _
      $region16: #{tpu_custom_call.1} parent=5 // pred_fallthru
        _
      %p155 = scmp.le.s32.totalorder 1, %s32
      %p156 = scmp.lt.s32.totalorder %s32, 9
      %p157 = pnand %p155, %p156
      %p158 = pneg %p157
      // Predicated region
      $region25: #{tpu_custom_call.1} parent=5 // pred_check
        _
      $region26: #{tpu_custom_call.1} parent=5 // pred_check_branch
        %160 = sbr.rel (%p157) target = $region28
      $region27: #{tpu_custom_call.1} parent=5 // pred_region
        %s161 = ssub.s32 %s32, 1
        %s162 = sld [smem:[#allocation5 + %s37]]
        %s163 = smul.u32 16, %s162
        %p164 = scmp.lt.s32.totalorder %s163, 63
        %s165 = scalar_select %p164, %s163, 63
        %s166 = smul.addr %s165, 8
        %s167 = scalar_lea.vmem %s3, %s166
        %p168 = pneg %p60
        %p169 = pneg %p57
        %s170 = sld [smem:[#allocation5 + %s37]]
        %p171 = scmp.lt.s32.totalorder %s170, 3
        %s172 = scalar_select %p171, %s170, 3
        %s173 = smul.addr %s172, 8
        %s174 = scalar_lea.vmem %s4, %s173
        %p175 = pneg %p88
        %p176 = pneg %p85
        %p177 = pneg %p116
        %p178 = pneg %p113
        %s179 = sand.u32 %s103, 1
        %s180 = scalar_lea.sflag [#allocation8], %s179
        %s181 = sand.u32 %s103, 1
        %s182 = smul.addr %s181, 4
        %s183 = scalar_lea.vmem [#allocation7], %s182
        %s184 = sld [smem:[#allocation5 + %s37]]
        %s185 = smul.u32 16, %s184
        %p186 = scmp.lt.s32.totalorder %s185, 63
        %s187 = scalar_select %p186, %s185, 63
        %s188 = smul.addr %s187, 8
        %s189 = scalar_lea.vmem %s3, %s188
        %s190 = sld [smem:[#allocation5 + %s37]]
        %s191 = smul.u32 16, %s190
        %s192 = sld [smem:[#allocation5 + %s37]]
        %p193 = scmp.lt.s32.totalorder %s192, 3
        %s194 = scalar_select %p193, %s192, 3
        %s195 = smul.addr %s194, 8
        %s196 = scalar_lea.vmem %s4, %s195
        %s197 = sld [smem:[#allocation5 + %s37]]
        %s198 = sld [smem:[#allocation4 + %s37]]
        %s199 = sld [smem:[#allocation6 + %s37]]
        %s200 = sld [smem:[#allocation4 + %s37]]
        %s201 = smul.u32 %s200, 128
        %s202 = sand.u32 %s199, 1
        %p203 = scmp.ne.s32.totalorder %s202, 0
        // Predicated region
        $region29: #{tpu_custom_call.1} parent=27 // pred_check
          %p204 = pneg %p203
        $region30: #{tpu_custom_call.1} parent=27 // pred_check_branch
          %206 = sbr.rel (%p204) target = $region32
        $region31: #{tpu_custom_call.1} parent=27 // pred_region
          %207 = vst [vmem:[#allocation2] sm:$0x1f] 0.0
        $region32: #{tpu_custom_call.1} parent=27 // pred_fallthru
          _
        %s208 = sand.u32 %s199, 2
        %p209 = scmp.ne.s32.totalorder %s208, 0
        // Predicated region
        $region33: #{tpu_custom_call.1} parent=27 // pred_check
          %p210 = pneg %p209
        $region34: #{tpu_custom_call.1} parent=27 // pred_check_branch
          %212 = sbr.rel (%p210) target = $region36
        $region35: #{tpu_custom_call.1} parent=27 // pred_region
          %v213 = vld [vmem:[%s189] sm:$0xff]
          %v214 = vld [vmem:[%s189 + $0x8] sm:$0xff]
          %v215 = vld [vmem:[%s189 + $0x10] sm:$0xff]
          %v216 = vld [vmem:[%s189 + $0x18] sm:$0xff]
          %v217 = vld [vmem:[%s189 + $0x20] sm:$0xff]
          %v218 = vld [vmem:[%s189 + $0x28] sm:$0xff]
          %v219 = vld [vmem:[%s189 + $0x30] sm:$0xff]
          %v220 = vld [vmem:[%s189 + $0x38] sm:$0xff]
          %v221 = vld [vmem:[%s189 + $0x40] sm:$0xff]
          %v222 = vld [vmem:[%s189 + $0x48] sm:$0xff]
          %v223 = vld [vmem:[%s189 + $0x50] sm:$0xff]
          %v224 = vld [vmem:[%s189 + $0x58] sm:$0xff]
          %v225 = vld [vmem:[%s189 + $0x60] sm:$0xff]
          %v226 = vld [vmem:[%s189 + $0x68] sm:$0xff]
          %v227 = vld [vmem:[%s189 + $0x70] sm:$0xff]
          %v228 = vld [vmem:[%s189 + $0x78] sm:$0xff]
          %v229 = vstv %s201
          %v230 = vsub.s32 %v213, %v229
          %v231 = vsub.s32 %v214, %v229
          %v232 = vsub.s32 %v215, %v229
          %v233 = vsub.s32 %v216, %v229
          %v234 = vsub.s32 %v217, %v229
          %v235 = vsub.s32 %v218, %v229
          %v236 = vsub.s32 %v219, %v229
          %v237 = vsub.s32 %v220, %v229
          %v238 = vsub.s32 %v221, %v229
          %v239 = vsub.s32 %v222, %v229
          %v240 = vsub.s32 %v223, %v229
          %v241 = vsub.s32 %v224, %v229
          %v242 = vsub.s32 %v225, %v229
          %v243 = vsub.s32 %v226, %v229
          %v244 = vsub.s32 %v227, %v229
          %v245 = vsub.s32 %v228, %v229
          %v246 = vld [vmem:[%s196] sm:$0x1f]
          %v247 = vlaneseq
          %v248 = vand.u32 %v247, 127
          %249 = vset.pattern.permute.xlu0 0
          %250 = vperm.xlu0 %249, %v230
          %v251 = vpop.permute.xlu0 %250
          %252 = vset.pattern.permute.xlu0 0
          %253 = vperm.xlu0 %252, %v231
          %v254 = vpop.permute.xlu0 %253
          %255 = vset.pattern.permute.xlu0 0
          %256 = vperm.xlu0 %255, %v232
          %v257 = vpop.permute.xlu0 %256
          %258 = vset.pattern.permute.xlu0 0
          %259 = vperm.xlu0 %258, %v233
          %v260 = vpop.permute.xlu0 %259
          %261 = vset.pattern.permute.xlu0 0
          %262 = vperm.xlu0 %261, %v234
          %v263 = vpop.permute.xlu0 %262
          %264 = vset.pattern.permute.xlu0 0
          %265 = vperm.xlu0 %264, %v235
          %v266 = vpop.permute.xlu0 %265
          %267 = vset.pattern.permute.xlu0 0
          %268 = vperm.xlu0 %267, %v236
          %v269 = vpop.permute.xlu0 %268
          %270 = vset.pattern.permute.xlu0 0
          %271 = vperm.xlu0 %270, %v237
          %v272 = vpop.permute.xlu0 %271
          %273 = vset.pattern.permute.xlu0 0
          %274 = vperm.xlu0 %273, %v238
          %v275 = vpop.permute.xlu0 %274
          %276 = vset.pattern.permute.xlu0 0
          %277 = vperm.xlu0 %276, %v239
          %v278 = vpop.permute.xlu0 %277
          %279 = vset.pattern.permute.xlu0 0
          %280 = vperm.xlu0 %279, %v240
          %v281 = vpop.permute.xlu0 %280
          %282 = vset.pattern.permute.xlu0 0
          %283 = vperm.xlu0 %282, %v241
          %v284 = vpop.permute.xlu0 %283
          %285 = vset.pattern.permute.xlu0 0
          %286 = vperm.xlu0 %285, %v242
          %v287 = vpop.permute.xlu0 %286
          %288 = vset.pattern.permute.xlu0 0
          %289 = vperm.xlu0 %288, %v243
          %v290 = vpop.permute.xlu0 %289
          %291 = vset.pattern.permute.xlu0 0
          %292 = vperm.xlu0 %291, %v244
          %v293 = vpop.permute.xlu0 %292
          %294 = vset.pattern.permute.xlu0 0
          %295 = vperm.xlu0 %294, %v245
          %v296 = vpop.permute.xlu0 %295
          %vm297 = vcmp.eq.s32.totalorder %v251, %v248
          %vm298 = vcmp.eq.s32.totalorder %v254, %v248
          %vm299 = vcmp.eq.s32.totalorder %v257, %v248
          %vm300 = vcmp.eq.s32.totalorder %v260, %v248
          %vm301 = vcmp.eq.s32.totalorder %v263, %v248
          %vm302 = vcmp.eq.s32.totalorder %v266, %v248
          %vm303 = vcmp.eq.s32.totalorder %v269, %v248
          %vm304 = vcmp.eq.s32.totalorder %v272, %v248
          %vm305 = vcmp.eq.s32.totalorder %v275, %v248
          %vm306 = vcmp.eq.s32.totalorder %v278, %v248
          %vm307 = vcmp.eq.s32.totalorder %v281, %v248
          %vm308 = vcmp.eq.s32.totalorder %v284, %v248
          %vm309 = vcmp.eq.s32.totalorder %v287, %v248
          %vm310 = vcmp.eq.s32.totalorder %v290, %v248
          %vm311 = vcmp.eq.s32.totalorder %v293, %v248
          %vm312 = vcmp.eq.s32.totalorder %v296, %v248
          %v313 = vsel %vm297, 1, 0
          %v314 = vsel %vm298, 1, 0
          %v315 = vsel %vm299, 1, 0
          %v316 = vsel %vm300, 1, 0
          %v317 = vsel %vm301, 1, 0
          %v318 = vsel %vm302, 1, 0
          %v319 = vsel %vm303, 1, 0
          %v320 = vsel %vm304, 1, 0
          %v321 = vsel %vm305, 1, 0
          %v322 = vsel %vm306, 1, 0
          %v323 = vsel %vm307, 1, 0
          %v324 = vsel %vm308, 1, 0
          %v325 = vsel %vm309, 1, 0
          %v326 = vsel %vm310, 1, 0
          %v327 = vsel %vm311, 1, 0
          %v328 = vsel %vm312, 1, 0
          %v329 = vcvt.s32.f32 %v313
          %v330 = vcvt.s32.f32 %v314
          %v331 = vcvt.s32.f32 %v315
          %v332 = vcvt.s32.f32 %v316
          %v333 = vcvt.s32.f32 %v317
          %v334 = vcvt.s32.f32 %v318
          %v335 = vcvt.s32.f32 %v319
          %v336 = vcvt.s32.f32 %v320
          %v337 = vcvt.s32.f32 %v321
          %v338 = vcvt.s32.f32 %v322
          %v339 = vcvt.s32.f32 %v323
          %v340 = vcvt.s32.f32 %v324
          %v341 = vcvt.s32.f32 %v325
          %v342 = vcvt.s32.f32 %v326
          %v343 = vcvt.s32.f32 %v327
          %v344 = vcvt.s32.f32 %v328
          %v345 = vld [vmem:[#allocation2] sm:$0x1f]
          %346 = vmatpush.msra.mxu0 %v344
          %347 = vmatpush.msra.mxu0 %v343
          %348 = vmatpush.msra.mxu0 %v342
          %349 = vmatpush.msra.mxu0 %v341
          %350 = vmatpush.msra.mxu0 %v340
          %351 = vmatpush.msra.mxu0 %v339
          %352 = vmatpush.msra.mxu0 %v338
          %353 = vmatpush.msra.mxu0 %v337
          %354 = vmatpush.msra.mxu0 %v336
          %355 = vmatpush.msra.mxu0 %v335
          %356 = vmatpush.msra.mxu0 %v334
          %357 = vmatpush.msra.mxu0 %v333
          %358 = vmatpush.msra.mxu0 %v332
          %359 = vmatpush.msra.mxu0 %v331
          %360 = vmatpush.msra.mxu0 %v330
          %361 = vmatpush.msra.mxu0 %v329
          %362 = vmatmul.f32.gmra.mxu0 %v246
          %v363 = vpop.f32.mrf.mxu0
          %v364 = vadd.f32 0.0, %v363
          %365 = vdwg.mxu0
          %v366 = vadd.f32 %v345, %v364
          %367 = vst [vmem:[#allocation2] sm:$0x1f] %v366
        $region36: #{tpu_custom_call.1} parent=27 // pred_fallthru
          _
        %s368 = sand.u32 %s199, 4
        %p369 = scmp.ne.s32.totalorder %s368, 0
        // Predicated region
        $region37: #{tpu_custom_call.1} parent=27 // pred_check
          %p370 = pneg %p369
        $region38: #{tpu_custom_call.1} parent=27 // pred_check_branch
          %372 = sbr.rel (%p370) target = $region40
        $region39: #{tpu_custom_call.1} parent=27 // pred_region
          %v373 = vld [vmem:[#allocation2] sm:$0x1f]
          %v374 = vmax.f32 %v373, 1.0
          %v375 = vrcp.pop %v374
          %v376 = vmul.f32 %v374, %v375
          %v377 = vsub.f32 1.0, %v376
          %v378 = vmul.f32 %v375, %v377
          %v379 = vadd.f32 %v375, %v378
          %vm380 = vweird.f32 %v374
          %vm381 = vweird.f32 %v375
          %vm382 = vmor %vm380, %vm381
          %v383 = vsel %vm382, %v375, %v379
          %v384 = vand.u32 2147483647, %v374
          %vm385 = vcmp.eq.f32.partialorder %v384, 8.507059e+37
          %v386 = vand.u32 %v374, 2147483648
          %v387 = vor.u32 1.1754944e-38, %v386
          %v388 = vsel %vm385, %v387, %v383
          %v389 = vmul.f32 1.0, %v388
          %v390 = vperm.slane %v389, 4
          %v391 = vmul.f32 %v373, %v390
          %392 = vst [vmem:[%s183] sm:$0xf] %v391
        $region40: #{tpu_custom_call.1} parent=27 // pred_fallthru
          _
        %s393 = sand.u32 %s103, 1
        %s394 = scalar_lea.sflag [#allocation8], %s393
        %s395 = sand.u32 %s103, 1
        %s396 = smul.addr %s395, 4
        %s397 = scalar_lea.vmem [#allocation7], %s396
        // Predicated region
        $region41: #{tpu_custom_call.1} parent=27 // pred_check
          %p398 = pneg %p113
        $region42: #{tpu_custom_call.1} parent=27 // pred_check_branch
          %400 = sbr.rel (%p398) target = $region44
        $region43: #{tpu_custom_call.1} parent=27 // pred_region
          %s401 = sld [smem:[#allocation4 + %s37]]
          %403 = vsyncadd %s394, 0
          %s404 = smul.addr %s401, 4
          %s405 = scalar_lea.hbm %s5, %s404
          %s407 = sshll.u32 %s397, 4
          %s408 = int_to_ptr.vmem [resolvable:$true] %s407
          %s409 = sshll.u32 %s405, 4
          %s410 = int_to_ptr.hbm [resolvable:$true] %s409
          %412 = dma.vmem_to_hbm [thread:$0]  %s408, 64, %s410, %s394
        $region44: #{tpu_custom_call.1} parent=27 // pred_fallthru
          _
      $region28: #{tpu_custom_call.1} parent=5 // pred_fallthru
        _
      %p413 = scmp.le.s32.totalorder 2, %s32
      // Predicated region
      $region45: #{tpu_custom_call.1} parent=5 // pred_check
        %p414 = pneg %p413
      $region46: #{tpu_custom_call.1} parent=5 // pred_check_branch
        %416 = sbr.rel (%p414) target = $region48
      $region47: #{tpu_custom_call.1} parent=5 // pred_region
        %s417 = ssub.s32 %s32, 2
        // Predicated region
        $region49: #{tpu_custom_call.1} parent=47 // pred_check
          %p418 = pneg %p119
        $region50: #{tpu_custom_call.1} parent=47 // pred_check_branch
          %420 = sbr.rel (%p418) target = $region52
        $region51: #{tpu_custom_call.1} parent=47 // pred_region
          %s421 = sand.u32 %s104, 1
          %s422 = scalar_lea.sflag [#allocation8], %s421
          %s423 = sand.u32 %s104, 1
          %s424 = smul.addr %s423, 4
          %s425 = scalar_lea.vmem [#allocation7], %s424
          %427 = dma.done %s422, 64
        $region52: #{tpu_custom_call.1} parent=47 // pred_fallthru
          _
      $region48: #{tpu_custom_call.1} parent=5 // pred_fallthru
        _
    $region6: #{tpu_custom_call.1} parent=1 // loop_footer
      %s36 = sadd.s32 1, %s32
    $region7: #{tpu_custom_call.1} parent=1 // loop_footer_branch
      %31 = sbr.rel target = $region3
    $region8: #{tpu_custom_call.1} parent=1 // loop_exit
      _
    %428 = vsyncpa [#allocation8], 1
    %s429 = scalar_lea.sflag [#allocation8], 1
    %430 = vsyncpa %s429, 1

</llo_original>
